<compile_context>
chip_gen: v7x
topology: tpu7x:2x2x1
jax: 0.10.0
libtpu: 0.0.40
codegen_flags: <defaults>
</compile_context>

<pallas_src>
import functools

import jax
import jax.numpy as jnp
from jax.experimental import pallas as pl
from jax.experimental.pallas import tpu as pltpu


def _round_up(x, m):
    return ((x + m - 1) // m) * m


def _causal_conv1d_kernel(x_ref, w_ref, b_ref, o_ref, halo_ref, *,
                          kernel_size, pad, tile_l, nb):
    """One (batch-block, length-tile) grid step.

    x_ref    : (NB, Cin, TILE_L)     input tile (NCL layout)
    w_ref    : (Cout, K*Cin)         weights, taps folded into the contraction
    b_ref    : (Cout, 1)             bias
    o_ref    : (NB, Cout, TILE_L)    output tile (lane-dense along length)
    halo_ref : (NB, Cin, max(pad,1)) last `pad` input columns of the previous
                                     length tile of each batch (causal history)
    """
    j = pl.program_id(1)

    if pad > 0:
        # First length tile of a batch block: causal left padding == zeros.
        @pl.when(j == 0)
        def _():
            halo_ref[...] = jnp.zeros_like(halo_ref)

    x = x_ref[...]                                         # (NB, Cin, TILE_L)

    if pad > 0:
        xe = jnp.concatenate([halo_ref[...], x], axis=-1)  # (NB, Cin, pad+TILE_L)
        # History for the next length tile (re-zeroed at j == 0).  For the
        # last tile of a batch block this may hold padded garbage; it is
        # never consumed by a valid output column.
        halo_ref[...] = x[:, :, tile_l - pad:]
    else:
        xe = x

    def unfold(xe_b):                     # (Cin, pad+TILE_L) -> (K*Cin, TILE_L)
        if kernel_size == 1:
            return xe_b[:, :tile_l]
        return jnp.concatenate(
            [xe_b[:, k:k + tile_l] for k in range(kernel_size)], axis=0)

    # Fold the NB batches onto the lane axis too: one MXU matmul per step.
    if nb == 1:
        x_unf = unfold(xe[0])                              # (K*Cin, TILE_L)
    else:
        x_unf = jnp.concatenate([unfold(xe[b]) for b in range(nb)], axis=-1)

    acc = jnp.dot(w_ref[...], x_unf,
                  preferred_element_type=jnp.float32)      # (Cout, NB*TILE_L)
    acc = acc + b_ref[...].astype(jnp.float32)

    for b in range(nb):
        o_ref[b] = acc[:, b * tile_l:(b + 1) * tile_l].astype(o_ref.dtype)


def _tpu_generation_params():
    kind = ""
    try:
        kind = jax.devices()[0].device_kind.lower()
    except Exception:
        pass
    if "v7" in kind:   # 64 MiB VMEM, ~3.2 TB/s HBM: biggest steps, least room
        return dict(step_bytes_target=6 << 20, vmem_budget=40 << 20,
                    vmem_cap=48 << 20)
    if "v6" in kind:   # 128 MiB VMEM, ~1.4 TB/s HBM
        return dict(step_bytes_target=3 << 20, vmem_budget=32 << 20,
                    vmem_cap=96 << 20)
    # v5e / v4 / unknown: conservative (~820 GB/s HBM, 16 MiB default scoped).
    return dict(step_bytes_target=1 << 20, vmem_budget=14 << 20,
                vmem_cap=64 << 20)


def _vmem_bytes(tile, nb, cin, cout, k, pad, itemsize):
    """All live VMEM for one grid step (not just the pipelined blocks)."""
    return (2 * nb * cin * tile * itemsize             # input block (double-buffered)
            + 2 * nb * cout * tile * itemsize          # output block (double-buffered)
            + nb * cin * (pad + tile) * itemsize       # xe = concat(halo, x)
            + k * cin * nb * tile * itemsize           # x_unf (K-tap unfold)
            + nb * cout * tile * 4                     # f32 accumulator
            + nb * cin * max(pad, 1) * itemsize        # halo scratch
            + 2 * (cout * k * cin + cout) * itemsize)  # weight + bias blocks


def _derive_tiling(n, cin, cout, l_out, k, pad, itemsize, params,
                   tile_l=None, batch_block=None):
    budget = params["vmem_budget"]
    target = params["step_bytes_target"]
    full_tile = max(_round_up(l_out, 128), 128)

    if tile_l is None:
        # Largest 128-multiple tile whose full working set fits the budget.
        a = itemsize * (3 * cin + 2 * cout + k * cin) + 4 * cout   # bytes / lane
        b = itemsize * (cin * pad + cin * max(pad, 1)
                        + 2 * (cout * k * cin + cout))
        t_budget = max((budget - b) // a, 128)
        tile = min(full_tile, (t_budget // 128) * 128)
        tile = max(tile, 128, _round_up(pad, 128))
    else:
        tile = tile_l
    assert tile % 128 == 0, tile
    assert pad <= tile, "causal halo wider than a length tile; raise tile_l"

    if batch_block is not None:
        nb = batch_block
    else:
        nb = 1
        step_bytes = (cin + cout) * tile * itemsize
        if tile >= full_tile and step_bytes < target and n > 1:
            want = -(-target // step_bytes)                         # ceil
            w_const = 2 * (cout * k * cin + cout) * itemsize
            per_nb = _vmem_bytes(tile, 1, cin, cout, k, pad, itemsize) - w_const
            nb_cap = max(1, (budget - w_const) // per_nb)
            # Keep >= 2 batch blocks so a multi-TensorCore chip can still
            # split the "parallel" batch-block axis.
            nb_max = int(min(n, want, max(1, n // 2), nb_cap))
            for d in range(nb_max, 0, -1):                          # divisor of n
                if n % d == 0:
                    nb = d
                    break
    nb = max(1, min(nb, n))
    return tile, nb


def causal_conv1d2(seq_ncl, weight, bias, *, kernel_size, dilation=1,
                   tile_l=None, batch_block=None):
    """seq_ncl: (N, Cin, L); weight: (Cout, Cin, K); bias: (Cout,).

    Returns (N, Cout, L_out) in PyTorch NCL layout,
    L_out = L + (K-1)*(dilation-1)  (== L for dilation == 1).
    """
    n, cin, length = seq_ncl.shape
    cout, wcin, wk = weight.shape
    assert wcin == cin and wk == kernel_size

    pad = (kernel_size - 1) * dilation
    l_out = length + pad - (kernel_size - 1)

    itemsize = jnp.dtype(seq_ncl.dtype).itemsize
    params = _tpu_generation_params()
    tile, nb = _derive_tiling(n, cin, cout, l_out, kernel_size, pad, itemsize,
                              params, tile_l=tile_l, batch_block=batch_block)

    num_batch_blocks = pl.cdiv(n, nb)
    num_len_tiles = pl.cdiv(l_out, tile)
    in_len_blocks = pl.cdiv(length, tile)

    # Tiny parameter reshapes (K*Cin*Cout elements) -- negligible traffic.
    # weight (Cout, Cin, K) -> (Cout, K*Cin), column index k*Cin + ci.
    w_flat = jnp.transpose(weight, (0, 2, 1)).reshape(cout, kernel_size * cin)
    w_flat = w_flat.astype(seq_ncl.dtype)
    b_col = bias.reshape(cout, 1).astype(seq_ncl.dtype)

    kernel = functools.partial(_causal_conv1d_kernel, kernel_size=kernel_size,
                               pad=pad, tile_l=tile, nb=nb)

    def x_index(b, j):
        # dilation > 1 makes L_out > L: clamp so the input block never walks
        # past the end of the input.  Valid output columns of the extra tail
        # tile only read the halo, never this (re-read) block.
        return (b, 0, jnp.minimum(j, in_len_blocks - 1))

    est_vmem = _vmem_bytes(tile, nb, cin, cout, kernel_size, pad, itemsize)
    vmem_limit = int(min(params["vmem_cap"],
                         max(params["vmem_budget"], est_vmem * 5 // 4)
                         + (8 << 20)))

    cost = pl.CostEstimate(
        flops=2 * n * l_out * kernel_size * cin * cout,
        transcendentals=0,
        bytes_accessed=(n * cin * length + n * cout * l_out
                        + cout * cin * kernel_size + cout) * itemsize)

    return pl.pallas_call(
        kernel,
        out_shape=jax.ShapeDtypeStruct((n, cout, l_out), seq_ncl.dtype),
        grid_spec=pltpu.PrefetchScalarGridSpec(
            num_scalar_prefetch=0,
            grid=(num_batch_blocks, num_len_tiles),
            in_specs=[
                pl.BlockSpec((nb, cin, tile), x_index),
                pl.BlockSpec((cout, kernel_size * cin), lambda b, j: (0, 0)),
                pl.BlockSpec((cout, 1), lambda b, j: (0, 0)),
            ],
            out_specs=pl.BlockSpec((nb, cout, tile), lambda b, j: (b, 0, j)),
            scratch_shapes=[pltpu.VMEM((nb, cin, max(pad, 1)), seq_ncl.dtype)],
        ),
        compiler_params=pltpu.CompilerParams(
            # Batch blocks parallel (megacore); length sequential -- the halo
            # carry requires in-order execution of the innermost axis.
            dimension_semantics=("parallel", "arbitrary"),
            vmem_limit_bytes=vmem_limit),
        cost_estimate=cost,
    )(seq_ncl, w_flat, b_col)


def _reference(seq, weight, bias, kernel_size, dilation):
    pad = (kernel_size - 1) * dilation
    xp = jnp.pad(seq, ((0, 0), (0, 0), (pad, 0)))
    y = jax.lax.conv_general_dilated(
        xp, weight, window_strides=(1,), padding="VALID",
        dimension_numbers=("NCH", "OIH", "NCH"),
        precision=jax.lax.Precision.HIGHEST)
    return y + bias[None, :, None]


if __name__ == "__main__":
    key = jax.random.PRNGKey(0)
    cases = [
        # (batch, cin, cout, length, K, dilation, tile_l, batch_block)
        (2, 4, 8, 512, 3, 1, None, None),   # auto tiling: one full-length tile
        (2, 4, 8, 512, 3, 1, 256, None),    # forced multi-tile: halo carry
        (2, 4, 8, 256, 3, 2, 128, None),    # dilation>1: tail tile + input clamp
        (8, 4, 8, 128, 3, 1, None, None),   # short L, larger N: multi-batch blocks
        (2, 4, 8, 16, 3, 1, None, None),    # tiny: single partial 128-lane tile
        (2, 4, 8, 256, 1, 1, None, None),   # K == 1 (no causal padding)
    ]
    for (batch, cin, cout, length, K, dil, tl, bb) in cases:
        key, k_x, k_w, k_b = jax.random.split(key, 4)
        seq = jax.random.normal(k_x, (batch, cin, length), dtype=jnp.float32)
        fan_in = cin * K
        bound = 1.0 / (fan_in ** 0.5)
        weight = jax.random.uniform(k_w, (cout, cin, K), minval=-bound,
                                    maxval=bound, dtype=jnp.float32)
        bias = jax.random.uniform(k_b, (cout,), minval=-bound, maxval=bound,
                                  dtype=jnp.float32)

        out = causal_conv1d2(seq, weight, bias, kernel_size=K, dilation=dil,
                             tile_l=tl, batch_block=bb)
        out = jax.block_until_ready(out)
        ref = _reference(seq, weight, bias, K, dil)

        l_out = length + (K - 1) * (dil - 1)
        assert out.shape == (batch, cout, l_out), (out.shape, (batch, cout, l_out))
        assert ref.shape == out.shape, (ref.shape, out.shape)
        max_err = float(jnp.max(jnp.abs(out - ref)))
        assert jnp.allclose(out, ref, atol=1e-3, rtol=1e-3), (
            (batch, cin, cout, length, K, dil, tl, bb), max_err)

    print("KERNEL_OK")
</pallas_src>

<mosaic_0001>
module attributes {stable_mosaic.version = 11 : i64} {
  func.func @_causal_conv1d_kernel(%arg0: i32, %arg1: i32, %arg2: memref<1x4x512xf32, #tpu.memory_space<vmem>>, %arg3: memref<8x12xf32, #tpu.memory_space<vmem>>, %arg4: memref<8x1xf32, #tpu.memory_space<vmem>>, %arg5: memref<1x8x512xf32, #tpu.memory_space<vmem>>, %arg6: memref<1x4x2xf32, #tpu.memory_space<vmem>>) attributes {dimension_semantics = [#tpu.dimension_semantics<parallel>, #tpu.dimension_semantics<arbitrary>], iteration_bounds = array<i64: 2, 1>, scalar_prefetch = 0 : i64, scratch_operands = 1 : i64, tpu.core_type = #tpu.core_type<tc>, window_params = [{transform_indices = @transform_0, window_bounds = array<i64: 1, 4, 512>}, {pipeline_mode = #tpu.pipeline_mode<synchronous>, transform_indices = @transform_1, window_bounds = array<i64: 8, 12>}, {pipeline_mode = #tpu.pipeline_mode<synchronous>, transform_indices = @transform_2, window_bounds = array<i64: 8, 1>}, {transform_indices = @transform_3, window_bounds = array<i64: 1, 8, 512>}]} {
    %c0_i32 = arith.constant 0 : i32
    %0 = arith.cmpi eq, %arg1, %c0_i32 : i32
    %1 = arith.extui %0 : i1 to i32
    %c0_i32_0 = arith.constant 0 : i32
    %2 = arith.cmpi ne, %1, %c0_i32_0 : i32
    scf.if %2 {
      %cst_16 = arith.constant 0.000000e+00 : f32
      %21 = vector.broadcast %cst_16 : f32 to vector<1x4x2xf32>
      %c0_17 = arith.constant 0 : index
      %c0_18 = arith.constant 0 : index
      %c0_19 = arith.constant 0 : index
      %22 = vector.load %arg6[%c0_17, %c0_18, %c0_19] : memref<1x4x2xf32, #tpu.memory_space<vmem>>, vector<1x4x2xf32>
      tpu.vector_store %arg6[%c0_17, %c0_18, %c0_19], %21 {strides = array<i32>} : memref<1x4x2xf32, #tpu.memory_space<vmem>>, vector<1x4x2xf32>,
    } else {
    }
    %c0 = arith.constant 0 : index
    %c0_1 = arith.constant 0 : index
    %c0_2 = arith.constant 0 : index
    %3 = vector.load %arg2[%c0, %c0_1, %c0_2] : memref<1x4x512xf32, #tpu.memory_space<vmem>>, vector<1x4x512xf32>
    %c0_3 = arith.constant 0 : index
    %c0_4 = arith.constant 0 : index
    %c0_5 = arith.constant 0 : index
    %4 = vector.load %arg6[%c0_3, %c0_4, %c0_5] : memref<1x4x2xf32, #tpu.memory_space<vmem>>, vector<1x4x2xf32>
    %5 = tpu.concatenate %4, %3 in 2 : vector<1x4x2xf32>, vector<1x4x512xf32> -> vector<1x4x514xf32>
    %6 = vector.extract_strided_slice %3 {offsets = [0, 0, 510], sizes = [1, 4, 2], strides = [1, 1, 1]} : vector<1x4x512xf32> to vector<1x4x2xf32>
    %c0_6 = arith.constant 0 : index
    %c0_7 = arith.constant 0 : index
    %c0_8 = arith.constant 0 : index
    %7 = vector.load %arg6[%c0_6, %c0_7, %c0_8] : memref<1x4x2xf32, #tpu.memory_space<vmem>>, vector<1x4x2xf32>
    tpu.vector_store %arg6[%c0_6, %c0_7, %c0_8], %6 {strides = array<i32>} : memref<1x4x2xf32, #tpu.memory_space<vmem>>, vector<1x4x2xf32>,
    %8 = vector.shape_cast %5 : vector<1x4x514xf32> to vector<4x514xf32>
    %9 = vector.extract_strided_slice %8 {offsets = [0, 0], sizes = [4, 512], strides = [1, 1]} : vector<4x514xf32> to vector<4x512xf32>
    %10 = vector.extract_strided_slice %8 {offsets = [0, 1], sizes = [4, 512], strides = [1, 1]} : vector<4x514xf32> to vector<4x512xf32>
    %11 = vector.extract_strided_slice %8 {offsets = [0, 2], sizes = [4, 512], strides = [1, 1]} : vector<4x514xf32> to vector<4x512xf32>
    %12 = tpu.concatenate %9, %10, %11 in 0 : vector<4x512xf32>, vector<4x512xf32>, vector<4x512xf32> -> vector<12x512xf32>
    %c0_9 = arith.constant 0 : index
    %c0_10 = arith.constant 0 : index
    %13 = vector.load %arg3[%c0_9, %c0_10] : memref<8x12xf32, #tpu.memory_space<vmem>>, vector<8x12xf32>
    %cst = arith.constant dense<0.000000e+00> : vector<8x512xf32>
    %14 = tpu.matmul %13, %12, %cst {dimension_numbers = #tpu.dot_dimension_numbers<[1], [0], [0], [1], [0, 0, 1, 1], [], []>} : vector<8x12xf32>, vector<12x512xf32>, vector<8x512xf32> -> vector<8x512xf32>
    %c0_11 = arith.constant 0 : index
    %c0_12 = arith.constant 0 : index
    %15 = vector.load %arg4[%c0_11, %c0_12] : memref<8x1xf32, #tpu.memory_space<vmem>>, vector<8x1xf32>
    %16 = vector.broadcast %15 : vector<8x1xf32> to vector<8x512xf32>
    %17 = arith.addf %14, %16 : vector<8x512xf32>
    %c0_13 = arith.constant 0 : index
    %c0_14 = arith.constant 0 : index
    %c0_15 = arith.constant 0 : index
    %18 = vector.load %arg5[%c0_13, %c0_14, %c0_15] : memref<1x8x512xf32, #tpu.memory_space<vmem>>, vector<1x8x512xf32>
    %19 = vector.shape_cast %18 : vector<1x8x512xf32> to vector<8x512xf32>
    %20 = vector.shape_cast %17 : vector<8x512xf32> to vector<1x8x512xf32>
    tpu.vector_store %arg5[%c0_13, %c0_14, %c0_15], %20 {strides = array<i32>} : memref<1x8x512xf32, #tpu.memory_space<vmem>>, vector<1x8x512xf32>,
    return
  }
  func.func @transform_0(%arg0: i32, %arg1: i32) -> (i32, i32, i32) {
    %c0_i32 = arith.constant 0 : i32
    %0 = arith.minsi %arg1, %c0_i32 : i32
    %c0_i32_0 = arith.constant 0 : i32
    %c0_i32_1 = arith.constant 0 : i32
    return %arg0, %c0_i32_0, %0 : i32, i32, i32
  }
  func.func @transform_1(%arg0: i32, %arg1: i32) -> (i32, i32) {
    %c0_i32 = arith.constant 0 : i32
    %c0_i32_0 = arith.constant 0 : i32
    %c0_i32_1 = arith.constant 0 : i32
    return %c0_i32, %c0_i32_0 : i32, i32
  }
  func.func @transform_2(%arg0: i32, %arg1: i32) -> (i32, i32) {
    %c0_i32 = arith.constant 0 : i32
    %c0_i32_0 = arith.constant 0 : i32
    %c0_i32_1 = arith.constant 0 : i32
    return %c0_i32, %c0_i32_0 : i32, i32
  }
  func.func @transform_3(%arg0: i32, %arg1: i32) -> (i32, i32, i32) {
    %c0_i32 = arith.constant 0 : i32
    %c0_i32_0 = arith.constant 0 : i32
    return %arg0, %c0_i32, %arg1 : i32, i32, i32
  }
}

</mosaic_0001>

<llo_original>
// kernel: tpu_custom_call.1
$region0: #{tpu_custom_call.1}
  #allocation0 [shape = 'u32[]', space=smem, size = 0x4, offset = 0x4, fixed_abs, tag = 'smem constant byte address 0x4 - core index']
  #allocation1 [shape = 'u32[144,128]{1,0:T(1,128)}', space=vmem, size = 0x12000, scoped, tag = 'internal scratch']
  #allocation2 [shape = 'f32[1,4,2]{2,1,0:T(4,128)}', space=vmem, size = 0x800, scoped, tag = 'scratch operand']
  %s0 = inlined_call_operand.hbm [shape: f32[2,4,512], index: 0, kind: input, shape index: {}]
  %s1 = inlined_call_operand.vmem [shape: f32[8,12], index: 1, kind: input, shape index: {}]
  %s2 = inlined_call_operand.vmem [shape: f32[8,1], index: 2, kind: input, shape index: {}]
  %s3 = inlined_call_operand.hbm [shape: f32[2,8,512], index: 3, kind: output, shape index: {}]
  %s4 = sld [smem:[#allocation0]]
  $region53: #{tpu_custom_call.1} parent=0
    _
  %s6 = ssub.s32 1, %s4
  %s7 = scalar_select 0, %s6, %s4
  $region1: #{tpu_custom_call.1} parent=0
    #allocation3 [shape = 'u8[16384]{0}', space=vmem, size = 0x4000, scoped, tag = 'input window, operand 0']
    #allocation4 [shape = 's32[2]{0}', space=sflag, size = 0x8, scoped, tag = 'scoped memory for tpu_custom_call.1']
    #allocation5 [shape = 's32[2]{0}', space=sflag, size = 0x8, scoped, tag = 'scoped memory for tpu_custom_call.1']
    #allocation6 [shape = 'u8[32768]{0}', space=vmem, size = 0x8000, scoped, tag = 'output window, operand 0']
    %8 = vsyncpa [#allocation4], 0
    %s9 = scalar_lea.sflag [#allocation4], 1
    %10 = vsyncpa %s9, 0
    %11 = vsyncpa [#allocation5], 0
    %s12 = scalar_lea.sflag [#allocation5], 1
    %13 = vsyncpa %s12, 0
    loop: start=0, step=1, limit=4
    $region2: #{tpu_custom_call.1} parent=1 // loop_pre_header
      _
    $region3: #{tpu_custom_call.1} parent=1 // loop_header
      %s15 = sphi 0, %s19
      %p16 = scmp.ge.s32.totalorder %s15, 4
      %s22 = sphi 0, %s34
      %s23 = sphi 0, %s30
      %s24 = sphi 0, %s22
      %s25 = sphi 0, %s23
      %s26 = sphi 0, %s24
      %s27 = sphi 0, %s25
      %s43 = sphi 0, %s45
      %s46 = sphi 0, %s43
      %s47 = sphi 0, %s46
      %s63 = sphi 0, %s47
      %s67 = sphi 0, %s67
      %s69 = sphi 0, %s67
      %s70 = sphi 0, %s69
      %s84 = sphi 0, %s70
      %s88 = sphi 0, %s88
      %s90 = sphi 0, %s88
      %s91 = sphi 0, %s90
      %s105 = sphi 0, %s91
      %s113 = sphi 0, %s115
      %s116 = sphi 0, %s113
      %s117 = sphi 0, %s116
      %s133 = sphi 0, %s117
    $region4: #{tpu_custom_call.1} parent=1 // loop_header_branch
      %18 = sbr.rel (%p16) target = $region8
    $region5: #{tpu_custom_call.1} parent=1 // loop_body
      %s20 = ssub.s32 %s15, 1
      %s21 = ssub.s32 %s15, 2
      %s28 = sadd.s32 1, %s23
      %p29 = scmp.ge.s32.totalorder %s28, 1
      %s30 = scalar_select %p29, 0, %s28
      %s31 = sadd.s32 1, %s22
      %s32 = scalar_select %p29, %s31, %s22
      %p33 = scmp.ge.s32.totalorder %s32, 2
      %s34 = scalar_select %p33, 0, %s32
      %p35 = scmp.lt.s32.totalorder %s23, 0
      %s36 = scalar_select %p35, %s23, 0
      %p37 = scmp.lt.s32.totalorder %s30, 0
      %s38 = scalar_select %p37, %s30, 0
      %s39 = ssub.s32 %s22, %s34
      %s40 = ssub.s32 %s36, %s38
      %s41 = sor.u32 %s39, %s40
      %p42 = scmp.eq.s32.totalorder %s41, 0
      %s44 = sadd.s32 %s43, 1
      %s45 = scalar_select %p42, %s43, %s44
      %p48 = pneg %p42
      %p49 = scmp.eq.s32.totalorder %s15, 1
      %p50 = por %p48, %p49
      %p51 = scmp.ne.s32.totalorder %s43, %s46
      %p52 = scmp.eq.s32.totalorder %s15, 0
      %p53 = por %p51, %p52
      %p54 = scmp.ne.s32.totalorder %s43, %s46
      %p55 = scmp.eq.s32.totalorder %s20, 1
      %p56 = por %p54, %p55
      %p57 = scmp.ne.s32.totalorder %s46, %s47
      %p58 = scmp.eq.s32.totalorder %s20, 0
      %p59 = por %p57, %p58
      %p60 = scmp.ne.s32.totalorder %s46, %s47
      %p61 = scmp.eq.s32.totalorder %s21, 1
      %p62 = por %p60, %p61
      %p64 = scmp.ne.s32.totalorder %s47, %s63
      %p65 = scmp.eq.s32.totalorder %s21, 0
      %p66 = por %p64, %p65
      %s68 = sadd.s32 %s67, 1
      %p71 = scmp.eq.s32.totalorder %s15, 1
      %p72 = scmp.ne.s32.totalorder %s67, %s69
      %p73 = scmp.eq.s32.totalorder %s15, 0
      %p74 = por %p72, %p73
      %p75 = scmp.ne.s32.totalorder %s67, %s69
      %p76 = scmp.eq.s32.totalorder %s20, 1
      %p77 = por %p75, %p76
      %p78 = scmp.ne.s32.totalorder %s69, %s70
      %p79 = scmp.eq.s32.totalorder %s20, 0
      %p80 = por %p78, %p79
      %p81 = scmp.ne.s32.totalorder %s69, %s70
      %p82 = scmp.eq.s32.totalorder %s21, 1
      %p83 = por %p81, %p82
      %p85 = scmp.ne.s32.totalorder %s70, %s84
      %p86 = scmp.eq.s32.totalorder %s21, 0
      %p87 = por %p85, %p86
      %s89 = sadd.s32 %s88, 1
      %p92 = scmp.eq.s32.totalorder %s15, 1
      %p93 = scmp.ne.s32.totalorder %s88, %s90
      %p94 = scmp.eq.s32.totalorder %s15, 0
      %p95 = por %p93, %p94
      %p96 = scmp.ne.s32.totalorder %s88, %s90
      %p97 = scmp.eq.s32.totalorder %s20, 1
      %p98 = por %p96, %p97
      %p99 = scmp.ne.s32.totalorder %s90, %s91
      %p100 = scmp.eq.s32.totalorder %s20, 0
      %p101 = por %p99, %p100
      %p102 = scmp.ne.s32.totalorder %s90, %s91
      %p103 = scmp.eq.s32.totalorder %s21, 1
      %p104 = por %p102, %p103
      %p106 = scmp.ne.s32.totalorder %s91, %s105
      %p107 = scmp.eq.s32.totalorder %s21, 0
      %p108 = por %p106, %p107
      %s109 = ssub.s32 %s22, %s34
      %s110 = ssub.s32 %s23, %s30
      %s111 = sor.u32 %s109, %s110
      %p112 = scmp.eq.s32.totalorder %s111, 0
      %s114 = sadd.s32 %s113, 1
      %s115 = scalar_select %p112, %s113, %s114
      %p118 = pneg %p112
      %p119 = scmp.eq.s32.totalorder %s15, 1
      %p120 = por %p118, %p119
      %p121 = scmp.ne.s32.totalorder %s113, %s116
      %p122 = scmp.eq.s32.totalorder %s15, 0
      %p123 = por %p121, %p122
      %p124 = scmp.ne.s32.totalorder %s113, %s116
      %p125 = scmp.eq.s32.totalorder %s20, 1
      %p126 = por %p124, %p125
      %p127 = scmp.ne.s32.totalorder %s116, %s117
      %p128 = scmp.eq.s32.totalorder %s20, 0
      %p129 = por %p127, %p128
      %p130 = scmp.ne.s32.totalorder %s116, %s117
      %p131 = scmp.eq.s32.totalorder %s21, 1
      %p132 = por %p130, %p131
      %p134 = scmp.ne.s32.totalorder %s117, %s133
      %p135 = scmp.eq.s32.totalorder %s21, 0
      %p136 = por %p134, %p135
      %p137 = scmp.le.s32.totalorder 1, %s15
      %p138 = scmp.lt.s32.totalorder %s15, 3
      %p139 = pnand %p137, %p138
      %p140 = pneg %p139
      // Predicated region
      $region9: #{tpu_custom_call.1} parent=5 // pred_check
        _
      $region10: #{tpu_custom_call.1} parent=5 // pred_check_branch
        %142 = sbr.rel (%p139) target = $region12
      $region11: #{tpu_custom_call.1} parent=5 // pred_region
        %s143 = ssub.s32 %s15, 1
        // Predicated region
        $region13: #{tpu_custom_call.1} parent=11 // pred_check
          %p144 = pneg %p80
        $region14: #{tpu_custom_call.1} parent=11 // pred_check_branch
          %146 = sbr.rel (%p144) target = $region16
        $region15: #{tpu_custom_call.1} parent=11 // pred_region
          _
        $region16: #{tpu_custom_call.1} parent=11 // pred_fallthru
          _
        // Predicated region
        $region17: #{tpu_custom_call.1} parent=11 // pred_check
          %p147 = pneg %p101
        $region18: #{tpu_custom_call.1} parent=11 // pred_check_branch
          %149 = sbr.rel (%p147) target = $region20
        $region19: #{tpu_custom_call.1} parent=11 // pred_region
          _
        $region20: #{tpu_custom_call.1} parent=11 // pred_fallthru
          _
      $region12: #{tpu_custom_call.1} parent=5 // pred_fallthru
        _
      %p150 = scmp.lt.s32.totalorder %s15, 2
      // Predicated region
      $region21: #{tpu_custom_call.1} parent=5 // pred_check
        %p151 = pneg %p150
      $region22: #{tpu_custom_call.1} parent=5 // pred_check_branch
        %153 = sbr.rel (%p151) target = $region24
      $region23: #{tpu_custom_call.1} parent=5 // pred_region
        // Predicated region
        $region25: #{tpu_custom_call.1} parent=23 // pred_check
          %p154 = pneg %p53
        $region26: #{tpu_custom_call.1} parent=23 // pred_check_branch
          %156 = sbr.rel (%p154) target = $region28
        $region27: #{tpu_custom_call.1} parent=23 // pred_region
          %s157 = sand.u32 %s43, 1
          %s158 = scalar_lea.sflag [#allocation4], %s157
          %s159 = sand.u32 %s43, 1
          %s160 = smul.addr %s159, 16
          %s161 = scalar_lea.vmem [#allocation3], %s160
          %p162 = scmp.lt.s32.totalorder %s23, 0
          %s163 = scalar_select %p162, %s23, 0
          %s164 = smul.u32 4, %s163
          %s166 = ssub.s32 256, 256
          %167 = vsyncadd %s158, %s166
          %s168 = smul.addr %s22, 4
          %s169 = sadd.s32 %s164, %s168
          %s170 = smul.addr %s169, 64
          %s171 = scalar_lea.hbm %s0, %s170
          %s173 = sshll.u32 %s161, 4
          %s174 = int_to_ptr.vmem [resolvable:$true] %s173
          %176 = dma.hbm_to_vmem [thread:$0]  %s171, 256, %s174, %s158
        $region28: #{tpu_custom_call.1} parent=23 // pred_fallthru
          _
      $region24: #{tpu_custom_call.1} parent=5 // pred_fallthru
        _
      %p177 = scmp.le.s32.totalorder 1, %s15
      %p178 = scmp.lt.s32.totalorder %s15, 3
      %p179 = pnand %p177, %p178
      %p180 = pneg %p179
      // Predicated region
      $region29: #{tpu_custom_call.1} parent=5 // pred_check
        _
      $region30: #{tpu_custom_call.1} parent=5 // pred_check_branch
        %182 = sbr.rel (%p179) target = $region32
      $region31: #{tpu_custom_call.1} parent=5 // pred_region
        %s183 = ssub.s32 %s15, 1
        %s184 = sand.u32 %s46, 1
        %s185 = scalar_lea.sflag [#allocation4], %s184
        %s186 = sand.u32 %s46, 1
        %s187 = smul.addr %s186, 16
        %s188 = scalar_lea.vmem [#allocation3], %s187
        // Predicated region
        $region33: #{tpu_custom_call.1} parent=31 // pred_check
          %p189 = pneg %p59
        $region34: #{tpu_custom_call.1} parent=31 // pred_check_branch
          %191 = sbr.rel (%p189) target = $region36
        $region35: #{tpu_custom_call.1} parent=31 // pred_region
          %192 = dma.done %s185, 256
        $region36: #{tpu_custom_call.1} parent=31 // pred_fallthru
          _
        %s193 = sand.u32 %s46, 1
        %s194 = scalar_lea.sflag [#allocation4], %s193
        %s195 = sand.u32 %s46, 1
        %s196 = smul.addr %s195, 16
        %s197 = scalar_lea.vmem [#allocation3], %s196
        %p198 = pneg %p59
        %p199 = pneg %p56
        %p200 = pneg %p80
        %p201 = pneg %p77
        %p202 = pneg %p101
        %p203 = pneg %p98
        %p204 = pneg %p129
        %p205 = pneg %p126
        %s206 = sand.u32 %s116, 1
        %s207 = scalar_lea.sflag [#allocation5], %s206
        %s208 = sand.u32 %s116, 1
        %s209 = smul.addr %s208, 32
        %s210 = scalar_lea.vmem [#allocation6], %s209
        %p211 = scmp.lt.s32.totalorder %s25, 0
        %s212 = scalar_select %p211, %s25, 0
        %s213 = smul.u32 4, %s212
        %s214 = smul.u32 4, %s25
        %p215 = scmp.eq.s32.totalorder %s25, 0
        // Predicated region
        $region37: #{tpu_custom_call.1} parent=31 // pred_check
          %p216 = pneg %p215
        $region38: #{tpu_custom_call.1} parent=31 // pred_check_branch
          %218 = sbr.rel (%p216) target = $region40
        $region39: #{tpu_custom_call.1} parent=31 // pred_region
          %vm219 = vcmask 11264
          %220 = vst.msk [vmem:[#allocation2] sm:$0xf] %vm219, 0.0
        $region40: #{tpu_custom_call.1} parent=31 // pred_fallthru
          _
        %v221 = vld [vmem:[%s188] sm:$0xff]
        %v222 = vld [vmem:[%s188 + $0x8] sm:$0xff]
        %v223 = vld [vmem:[#allocation2] sm:$0xf]
        %v226 = vcombine.high %v221, %v221
        %v227 = vcombine.high %v222, %v222
        %228 = vrot.lane.b32.xlu0 %v221, 2
        %v229 = vpop.permute.xlu0 %228
        %230 = vrot.lane.b32.xlu0 %v226, 2
        %v231 = vpop.permute.xlu0 %230
        %232 = vrot.lane.b32.xlu0 %v222, 2
        %v233 = vpop.permute.xlu0 %232
        %234 = vrot.lane.b32.xlu0 %v227, 2
        %v235 = vpop.permute.xlu0 %234
        %vm236 = vcmask 15360
        %v237 = vsel %vm236, %v229, %v231
        %v238 = vsel %vm236, %v231, %v233
        %v239 = vsel %vm236, %v233, %v235
        %v244 = vsel %vm236, %v223, %v229
        %vm246 = vcmask 11264
        %247 = vst.msk [vmem:[#allocation2] sm:$0xf] %vm246, %v235
        %v249 = vrot.slane %v244, 4
        %v250 = vrot.slane %v237, 4
        %v251 = vrot.slane %v238, 4
        %v252 = vrot.slane %v239, 4
        %v253 = vrot.slane %v235, 4
        %254 = vrot.lane.b32.xlu0 %v249, 127
        %v255 = vpop.permute.xlu0 %254
        %256 = vrot.lane.b32.xlu0 %v250, 127
        %v257 = vpop.permute.xlu0 %256
        %258 = vrot.lane.b32.xlu0 %v251, 127
        %v259 = vpop.permute.xlu0 %258
        %260 = vrot.lane.b32.xlu0 %v252, 127
        %v261 = vpop.permute.xlu0 %260
        %262 = vrot.lane.b32.xlu0 %v253, 127
        %v263 = vpop.permute.xlu0 %262
        %vm264 = vcmask 1039360
        %v265 = vsel %vm264, %v255, %v257
        %v266 = vsel %vm264, %v257, %v259
        %v267 = vsel %vm264, %v259, %v261
        %v268 = vsel %vm264, %v261, %v263
        %273 = vrot.lane.b32.xlu0 %v244, 126
        %v274 = vpop.permute.xlu0 %273
        %275 = vrot.lane.b32.xlu0 %v237, 126
        %v276 = vpop.permute.xlu0 %275
        %277 = vrot.lane.b32.xlu0 %v238, 126
        %v278 = vpop.permute.xlu0 %277
        %279 = vrot.lane.b32.xlu0 %v239, 126
        %v280 = vpop.permute.xlu0 %279
        %281 = vrot.lane.b32.xlu0 %v235, 126
        %v282 = vpop.permute.xlu0 %281
        %vm283 = vcmask 1031168
        %v284 = vsel %vm283, %v274, %v276
        %v285 = vsel %vm283, %v276, %v278
        %v286 = vsel %vm283, %v278, %v280
        %v287 = vsel %vm283, %v280, %v282
        %vm288 = vcmask 1043456
        %v289 = vsel %vm288, %v244, %v265
        %v290 = vsel %vm288, %v237, %v266
        %v291 = vsel %vm288, %v238, %v267
        %v292 = vsel %vm288, %v239, %v268
        %v293 = vld [vmem:[%s1] sm:$0xff]
        %v294 = vld [vmem:[%s2] sm:$0xff]
        %296 = vset.pattern.permute.xlu0 0
        %297 = vperm.xlu0 %296, %v294
        %v298 = vpop.permute.xlu0 %297
        %vm300 = vcmask 97280
        %v302 = vsel %vm300, %v293, 0
        %v304 = vsel %vm288, %v284, 0
        %v306 = vsel %vm288, %v285, 0
        %v308 = vsel %vm288, %v286, 0
        %v310 = vsel %vm288, %v287, 0
        %312 = vmatprep.subr.mxu0 %v290
        %313 = vmatpush1.msra.mxu0 %v289
        %314 = vmatprep.subr.mxu0 %v306
        %315 = vmatpush1.msra.mxu0 %v304
        %316 = vmatprep.subr.mxu0 0.0
        %317 = vmatpush1.msra.mxu0 0.0
        %318 = vmatprep.subr.mxu0 0.0
        %319 = vmatpush1.msra.mxu0 0.0
        %320 = vmatprep.subr.mxu0 0.0
        %321 = vmatpush1.msra.mxu0 0.0
        %322 = vmatprep.subr.mxu0 0.0
        %323 = vmatpush1.msra.mxu0 0.0
        %324 = vmatprep.subr.mxu0 0.0
        %325 = vmatpush1.msra.mxu0 0.0
        %326 = vmatprep.subr.mxu0 0.0
        %327 = vmatpush1.msra.mxu0 0.0
        %328 = vmatprep.subr.mxu0 0.0
        %329 = vmatpush1.msra.mxu0 0.0
        %330 = vmatprep.subr.mxu0 0.0
        %331 = vmatpush1.msra.mxu0 0.0
        %332 = vmatprep.subr.mxu0 0.0
        %333 = vmatpush1.msra.mxu0 0.0
        %334 = vmatprep.subr.mxu0 0.0
        %335 = vmatpush1.msra.mxu0 0.0
        %336 = vmatprep.subr.mxu0 0.0
        %337 = vmatpush1.msra.mxu0 0.0
        %338 = vmatprep.subr.mxu0 0.0
        %339 = vmatpush1.msra.mxu0 0.0
        %340 = vmatprep.subr.mxu0 0.0
        %341 = vmatpush1.msra.mxu0 0.0
        %342 = vmatprep.subr.mxu0 0.0
        %343 = vmatpush1.msra.mxu0 0.0
        %344 = vmatprep.subr.mxu0 0.0
        %345 = vmatpush1.msra.mxu0 0.0
        %346 = vmatprep.subr.mxu0 0.0
        %347 = vmatpush1.msra.mxu0 0.0
        %348 = vmatprep.subr.mxu0 0.0
        %349 = vmatpush1.msra.mxu0 0.0
        %350 = vmatprep.subr.mxu0 0.0
        %351 = vmatpush1.msra.mxu0 0.0
        %352 = vmatprep.subr.mxu0 0.0
        %353 = vmatpush1.msra.mxu0 0.0
        %354 = vmatprep.subr.mxu0 0.0
        %355 = vmatpush1.msra.mxu0 0.0
        %356 = vmatprep.subr.mxu0 0.0
        %357 = vmatpush1.msra.mxu0 0.0
        %358 = vmatprep.subr.mxu0 0.0
        %359 = vmatpush1.msra.mxu0 0.0
        %360 = vmatprep.subr.mxu0 0.0
        %361 = vmatpush1.msra.mxu0 0.0
        %362 = vmatprep.subr.mxu0 0.0
        %363 = vmatpush1.msra.mxu0 0.0
        %364 = vmatprep.subr.mxu0 0.0
        %365 = vmatpush1.msra.mxu0 0.0
        %366 = vmatprep.subr.mxu0 0.0
        %367 = vmatpush1.msra.mxu0 0.0
        %368 = vmatprep.subr.mxu0 0.0
        %369 = vmatpush1.msra.mxu0 0.0
        %370 = vmatprep.subr.mxu0 0.0
        %371 = vmatpush1.msra.mxu0 0.0
        %372 = vmatprep.subr.mxu0 0.0
        %373 = vmatpush1.msra.mxu0 0.0
        %374 = vmatprep.subr.mxu0 0.0
        %375 = vmatpush1.msra.mxu0 0.0
        %376 = vmatprep.mubr.f32.mxu0 0.0
        %377 = vmatmul.mubr.f32.gmra.mrb[0].mxu0 %v302
        %v378 = vpop.f32.mrb[0].mxu0
        %v379 = vadd.f32 %v298, %v378
        %v380 = vpop.f32.mrb[0].mxu0
        %v381 = vadd.f32 %v298, %v380
        %382 = vdwg.mxu0
        %383 = vmatprep.subr.mxu0 %v292
        %384 = vmatpush1.msra.mxu0 %v291
        %385 = vmatprep.subr.mxu0 %v310
        %386 = vmatpush1.msra.mxu0 %v308
        %387 = vmatprep.subr.mxu0 0.0
        %388 = vmatpush1.msra.mxu0 0.0
        %389 = vmatprep.subr.mxu0 0.0
        %390 = vmatpush1.msra.mxu0 0.0
        %391 = vmatprep.subr.mxu0 0.0
        %392 = vmatpush1.msra.mxu0 0.0
        %393 = vmatprep.subr.mxu0 0.0
        %394 = vmatpush1.msra.mxu0 0.0
        %395 = vmatprep.subr.mxu0 0.0
        %396 = vmatpush1.msra.mxu0 0.0
        %397 = vmatprep.subr.mxu0 0.0
        %398 = vmatpush1.msra.mxu0 0.0
        %399 = vmatprep.subr.mxu0 0.0
        %400 = vmatpush1.msra.mxu0 0.0
        %401 = vmatprep.subr.mxu0 0.0
        %402 = vmatpush1.msra.mxu0 0.0
        %403 = vmatprep.subr.mxu0 0.0
        %404 = vmatpush1.msra.mxu0 0.0
        %405 = vmatprep.subr.mxu0 0.0
        %406 = vmatpush1.msra.mxu0 0.0
        %407 = vmatprep.subr.mxu0 0.0
        %408 = vmatpush1.msra.mxu0 0.0
        %409 = vmatprep.subr.mxu0 0.0
        %410 = vmatpush1.msra.mxu0 0.0
        %411 = vmatprep.subr.mxu0 0.0
        %412 = vmatpush1.msra.mxu0 0.0
        %413 = vmatprep.subr.mxu0 0.0
        %414 = vmatpush1.msra.mxu0 0.0
        %415 = vmatprep.subr.mxu0 0.0
        %416 = vmatpush1.msra.mxu0 0.0
        %417 = vmatprep.subr.mxu0 0.0
        %418 = vmatpush1.msra.mxu0 0.0
        %419 = vmatprep.subr.mxu0 0.0
        %420 = vmatpush1.msra.mxu0 0.0
        %421 = vmatprep.subr.mxu0 0.0
        %422 = vmatpush1.msra.mxu0 0.0
        %423 = vmatprep.subr.mxu0 0.0
        %424 = vmatpush1.msra.mxu0 0.0
        %425 = vmatprep.subr.mxu0 0.0
        %426 = vmatpush1.msra.mxu0 0.0
        %427 = vmatprep.subr.mxu0 0.0
        %428 = vmatpush1.msra.mxu0 0.0
        %429 = vmatprep.subr.mxu0 0.0
        %430 = vmatpush1.msra.mxu0 0.0
        %431 = vmatprep.subr.mxu0 0.0
        %432 = vmatpush1.msra.mxu0 0.0
        %433 = vmatprep.subr.mxu0 0.0
        %434 = vmatpush1.msra.mxu0 0.0
        %435 = vmatprep.subr.mxu0 0.0
        %436 = vmatpush1.msra.mxu0 0.0
        %437 = vmatprep.subr.mxu0 0.0
        %438 = vmatpush1.msra.mxu0 0.0
        %439 = vmatprep.subr.mxu0 0.0
        %440 = vmatpush1.msra.mxu0 0.0
        %441 = vmatprep.subr.mxu0 0.0
        %442 = vmatpush1.msra.mxu0 0.0
        %443 = vmatprep.subr.mxu0 0.0
        %444 = vmatpush1.msra.mxu0 0.0
        %445 = vmatprep.subr.mxu0 0.0
        %446 = vmatpush1.msra.mxu0 0.0
        %447 = vmatprep.mubr.f32.mxu0 0.0
        %448 = vmatmul.mubr.f32.gmra.mrb[0].mxu0 %v302
        %v449 = vpop.f32.mrb[0].mxu0
        %v450 = vadd.f32 %v298, %v449
        %v451 = vpop.f32.mrb[0].mxu0
        %v452 = vadd.f32 %v298, %v451
        %453 = vdwg.mxu0
        %454 = vst [vmem:[%s210] sm:$0xff] %v379
        %455 = vst [vmem:[%s210 + $0x8] sm:$0xff] %v381
        %456 = vst [vmem:[%s210 + $0x10] sm:$0xff] %v450
        %457 = vst [vmem:[%s210 + $0x18] sm:$0xff] %v452
        %s458 = sand.u32 %s116, 1
        %s459 = scalar_lea.sflag [#allocation5], %s458
        %s460 = sand.u32 %s116, 1
        %s461 = smul.addr %s460, 32
        %s462 = scalar_lea.vmem [#allocation6], %s461
        // Predicated region
        $region41: #{tpu_custom_call.1} parent=31 // pred_check
          %p463 = pneg %p126
        $region42: #{tpu_custom_call.1} parent=31 // pred_check_branch
          %465 = sbr.rel (%p463) target = $region44
        $region43: #{tpu_custom_call.1} parent=31 // pred_region
          %s466 = smul.u32 4, %s25
          %s468 = ssub.s32 512, 512
          %469 = vsyncadd %s459, %s468
          %s470 = smul.addr %s24, 4
          %s471 = sadd.s32 %s466, %s470
          %s472 = smul.addr %s471, 128
          %s473 = scalar_lea.hbm %s3, %s472
          %s475 = sshll.u32 %s462, 4
          %s476 = int_to_ptr.vmem [resolvable:$true] %s475
          %478 = dma.vmem_to_hbm [thread:$0]  %s476, 512, %s473, %s459
        $region44: #{tpu_custom_call.1} parent=31 // pred_fallthru
          _
      $region32: #{tpu_custom_call.1} parent=5 // pred_fallthru
        _
      %p479 = scmp.le.s32.totalorder 2, %s15
      // Predicated region
      $region45: #{tpu_custom_call.1} parent=5 // pred_check
        %p480 = pneg %p479
      $region46: #{tpu_custom_call.1} parent=5 // pred_check_branch
        %482 = sbr.rel (%p480) target = $region48
      $region47: #{tpu_custom_call.1} parent=5 // pred_region
        %s483 = ssub.s32 %s15, 2
        // Predicated region
        $region49: #{tpu_custom_call.1} parent=47 // pred_check
          %p484 = pneg %p132
        $region50: #{tpu_custom_call.1} parent=47 // pred_check_branch
          %486 = sbr.rel (%p484) target = $region52
        $region51: #{tpu_custom_call.1} parent=47 // pred_region
          %s487 = sand.u32 %s117, 1
          %s488 = scalar_lea.sflag [#allocation5], %s487
          %s489 = sand.u32 %s117, 1
          %s490 = smul.addr %s489, 32
          %s491 = scalar_lea.vmem [#allocation6], %s490
          %492 = dma.done %s488, 512
        $region52: #{tpu_custom_call.1} parent=47 // pred_fallthru
          _
      $region48: #{tpu_custom_call.1} parent=5 // pred_fallthru
        _
    $region6: #{tpu_custom_call.1} parent=1 // loop_footer
      %s19 = sadd.s32 1, %s15
    $region7: #{tpu_custom_call.1} parent=1 // loop_footer_branch
      %14 = sbr.rel target = $region3
    $region8: #{tpu_custom_call.1} parent=1 // loop_exit
      _
    %493 = vsyncpa [#allocation4], 1
    %s494 = scalar_lea.sflag [#allocation4], 1
    %495 = vsyncpa %s494, 1
    %496 = vsyncpa [#allocation5], 1
    %s497 = scalar_lea.sflag [#allocation5], 1
    %498 = vsyncpa %s497, 1

</llo_original>
